<compile_context>
chip_gen: v6e
topology: v6e:2x2x1
jax: 0.10.0
libtpu: 0.0.40
codegen_flags: <defaults>
</compile_context>

<pallas_src>
import functools

import jax
import jax.numpy as jnp
from jax.experimental import pallas as pl
from jax.experimental.pallas import tpu as pltpu

LANES = 128
SUBLANES = 8
STEP_BYTES = 8 * 1024 * 1024      # both inputs together, per pipeline buffer (~4 MiB each)
VMEM_LIMIT = 40 * 1024 * 1024     # 16 MiB of buffers + headroom; safe on v7x (64 MiB/TC)


def _tensorcores_per_chip():
    # v7x has 2 TensorCores per chip ("parallel" axis shards across them);
    # v5e/v6e have 1, where an extra parallel axis is just a sequential loop.
    try:
        kind = jax.devices()[0].device_kind.lower()
    except Exception:
        return 1
    return 2 if "v7" in kind else 1


def _masked_mse_kernel(o_ref, t_ref, loss_ref, mask_ref, *, rows_valid, tile_rows):
    c = pl.program_id(0)          # parallel (core) axis
    i = pl.program_id(1)          # arbitrary (streaming/reduction) axis

    # Per-core accumulator init on the first streaming step.
    @pl.when(i == 0)
    def _():
        loss_ref[...] = jnp.zeros_like(loss_ref)
        mask_ref[...] = jnp.zeros_like(mask_ref)

    # Native-dtype loads, f32 compute on the VPU.
    t = t_ref[...].astype(jnp.float32)
    o = o_ref[...].astype(jnp.float32)
    d = t - o

    nv = tile_rows // SUBLANES

    def fold_add(sq, cnt):
        # (tile_rows, 128) -> (8, 128): whole-vreg sublane-group sums, pure VPU adds.
        loss_ref[...] += jnp.sum(sq.reshape(nv, SUBLANES, LANES), axis=0)
        mask_ref[...] += jnp.sum(cnt.reshape(nv, SUBLANES, LANES), axis=0)

    block_start = (c * pl.num_programs(1) + i) * tile_rows

    # Fast path: block fully inside the valid row range -> no iota mask needed.
    @pl.when(block_start + tile_rows <= rows_valid)
    def _():
        m = t != 0.0
        fold_add(jnp.where(m, d * d, 0.0), m.astype(jnp.float32))

    # Slow path: partial boundary block or clamped out-of-range block.  The
    # jnp.where select protects the sums from OOB garbage / re-read inf values.
    @pl.when(block_start + tile_rows > rows_valid)
    def _():
        row_ids = block_start + jax.lax.broadcasted_iota(
            jnp.int32, (tile_rows, LANES), 0)
        m = (row_ids < rows_valid) & (t != 0.0)
        fold_add(jnp.where(m, d * d, 0.0), m.astype(jnp.float32))


def masked_mse(output, target):
    """Pallas equivalent of MyMSE.forward(output, target)."""
    assert output.shape == target.shape
    o_flat = output.reshape(-1)
    t_flat = target.reshape(-1)
    n = o_flat.shape[0]

    o_bytes = jnp.dtype(o_flat.dtype).itemsize
    t_bytes = jnp.dtype(t_flat.dtype).itemsize

    # Alignment granularity respects dtype sublane packing: 8 rows f32,
    # 16 rows bf16, 32 rows int8/fp8.
    pack = max(1, 4 // min(o_bytes, t_bytes))
    align_rows = SUBLANES * pack
    align = align_rows * LANES

    n_groups = n // align
    main_rows = n_groups * align_rows
    n_main = main_rows * LANES

    # Tail (< align elements): handled with plain jnp, no whole-array pad/copy.
    tail_loss = jnp.float32(0.0)
    tail_cnt = jnp.float32(0.0)
    if n_main < n:
        to = o_flat[n_main:].astype(jnp.float32)
        tt = t_flat[n_main:].astype(jnp.float32)
        tm = tt != 0.0
        td = tt - to
        tail_loss = jnp.sum(jnp.where(tm, td * td, 0.0))
        tail_cnt = jnp.sum(tm.astype(jnp.float32))

    if main_rows == 0:
        # Tiny input (< one aligned row group): pure-jnp fallback.
        return tail_loss / (tail_cnt + 1e-15)

    o2 = o_flat[:n_main].reshape(main_rows, LANES)
    t2 = t_flat[:n_main].reshape(main_rows, LANES)

    # ~4 MiB per input per step, rounded down to the alignment granularity.
    tile_cap = (STEP_BYTES // (LANES * (o_bytes + t_bytes))) // align_rows * align_rows
    tile_cap = max(tile_cap, align_rows)
    tile_rows = min(tile_cap, main_rows)

    nblocks = -(-main_rows // tile_rows)
    num_cores = min(_tensorcores_per_chip(), nblocks)
    steps_per_core = -(-nblocks // num_cores)
    last_block = nblocks - 1

    def in_map(c, i):
        # Clamp fully-out-of-range blocks to the last valid block; their
        # contribution is zeroed in-kernel by the row-id validity mask.
        b = c * steps_per_core + i
        return (jnp.minimum(b, last_block), 0)

    out_block = pl.BlockSpec((None, SUBLANES, LANES), lambda c, i: (c, 0, 0))

    kernel = functools.partial(
        _masked_mse_kernel, rows_valid=main_rows, tile_rows=tile_rows)

    cost = pl.CostEstimate(
        flops=6 * n_main,
        transcendentals=0,
        bytes_accessed=n_main * (o_bytes + t_bytes)
        + 2 * num_cores * SUBLANES * LANES * 4,
    )

    loss_parts, mask_parts = pl.pallas_call(
        kernel,
        out_shape=(
            jax.ShapeDtypeStruct((num_cores, SUBLANES, LANES), jnp.float32),
            jax.ShapeDtypeStruct((num_cores, SUBLANES, LANES), jnp.float32),
        ),
        grid_spec=pltpu.PrefetchScalarGridSpec(
            num_scalar_prefetch=0,
            grid=(num_cores, steps_per_core),
            in_specs=[
                pl.BlockSpec((tile_rows, LANES), in_map),
                pl.BlockSpec((tile_rows, LANES), in_map),
            ],
            out_specs=(out_block, out_block),
        ),
        compiler_params=pltpu.CompilerParams(
            dimension_semantics=("parallel", "arbitrary"),
            vmem_limit_bytes=VMEM_LIMIT,
        ),
        cost_estimate=cost,
    )(o2, t2)

    # Tiny final cross-lane reduce + divide in the wrapper.
    loss_sum = jnp.sum(loss_parts) + tail_loss
    mask_sum = jnp.sum(mask_parts) + tail_cnt
    return loss_sum / (mask_sum + 1e-15)


def _reference(output, target):
    mask = (target != 0).astype(jnp.float32)
    loss = (target.astype(jnp.float32) - output.astype(jnp.float32)) ** 2 * mask
    return jnp.sum(loss) / (jnp.sum(mask) + 1e-15)


def _make_inputs(key, shape, dtype):
    k1, k2, k3 = jax.random.split(key, 3)
    o = jax.random.normal(k1, shape, dtype=jnp.float32).astype(dtype)
    t = jax.random.normal(k2, shape, dtype=jnp.float32)
    zm = jax.random.bernoulli(k3, p=0.3, shape=shape)
    t = jnp.where(zm, 0.0, t).astype(dtype)
    return o, t


if __name__ == "__main__":
    key = jax.random.PRNGKey(0)
    k1, k2, k3, k4 = jax.random.split(key, 4)

    # --- primary small test: NCHW batch=2, channels=4, spatial=16x16 (aligned) ---
    o, t = _make_inputs(k1, (2, 4, 16, 16), jnp.float32)
    got = jax.block_until_ready(masked_mse(o, t))
    want = jax.block_until_ready(_reference(o, t))
    assert jnp.allclose(got, want, rtol=1e-5, atol=1e-6), (got, want)

    # --- multi-block test: exercises the fast path + the masked boundary block ---
    o, t = _make_inputs(k2, (2, 4, 384, 384), jnp.float32)
    got = jax.block_until_ready(masked_mse(o, t))
    want = jax.block_until_ready(_reference(o, t))
    assert jnp.allclose(got, want, rtol=1e-4, atol=1e-6), (got, want)

    # --- unaligned test: kernel prefix + jnp tail, no padding copy ---
    o, t = _make_inputs(k3, (3, 5, 7, 11), jnp.float32)
    got = jax.block_until_ready(masked_mse(o, t))
    want = jax.block_until_ready(_reference(o, t))
    assert jnp.allclose(got, want, rtol=1e-5, atol=1e-6), (got, want)

    # --- bf16 test: native-dtype streaming, 16-row alignment, jnp tail ---
    o, t = _make_inputs(k4, (2, 4, 40, 40), jnp.bfloat16)
    got = jax.block_until_ready(masked_mse(o, t))
    want = jax.block_until_ready(_reference(o, t))
    assert jnp.allclose(got, want, rtol=1e-3, atol=1e-5), (got, want)

    print("KERNEL_OK")
</pallas_src>

<mosaic_0001>
module attributes {stable_mosaic.version = 11 : i64} {
  func.func @_masked_mse_kernel(%arg0: i32, %arg1: i32, %arg2: memref<16x128xf32, #tpu.memory_space<vmem>>, %arg3: memref<16x128xf32, #tpu.memory_space<vmem>>, %arg4: memref<1x8x128xf32, #tpu.memory_space<vmem>>, %arg5: memref<1x8x128xf32, #tpu.memory_space<vmem>>) attributes {dimension_semantics = [#tpu.dimension_semantics<parallel>, #tpu.dimension_semantics<arbitrary>], iteration_bounds = array<i64: 1, 1>, scalar_prefetch = 0 : i64, scratch_operands = 0 : i64, tpu.core_type = #tpu.core_type<tc>, window_params = [{transform_indices = @transform_0, window_bounds = array<i64: 16, 128>}, {transform_indices = @transform_1, window_bounds = array<i64: 16, 128>}, {transform_indices = @transform_2, window_bounds = array<i64: 1, 8, 128>}, {transform_indices = @transform_3, window_bounds = array<i64: 1, 8, 128>}]} {
    %c0_i32 = arith.constant 0 : i32
    %0 = arith.cmpi eq, %arg1, %c0_i32 : i32
    %1 = arith.extui %0 : i1 to i32
    %c0_i32_0 = arith.constant 0 : i32
    %2 = arith.cmpi ne, %1, %c0_i32_0 : i32
    scf.if %2 {
      %cst = arith.constant 0.000000e+00 : f32
      %17 = vector.broadcast %cst : f32 to vector<8x128xf32>
      %c0_10 = arith.constant 0 : index
      %c0_11 = arith.constant 0 : index
      %c0_12 = arith.constant 0 : index
      %18 = vector.load %arg4[%c0_10, %c0_11, %c0_12] : memref<1x8x128xf32, #tpu.memory_space<vmem>>, vector<1x8x128xf32>
      %19 = vector.shape_cast %18 : vector<1x8x128xf32> to vector<8x128xf32>
      %20 = vector.shape_cast %17 : vector<8x128xf32> to vector<1x8x128xf32>
      tpu.vector_store %arg4[%c0_10, %c0_11, %c0_12], %20 {strides = array<i32>} : memref<1x8x128xf32, #tpu.memory_space<vmem>>, vector<1x8x128xf32>,
      %cst_13 = arith.constant 0.000000e+00 : f32
      %21 = vector.broadcast %cst_13 : f32 to vector<8x128xf32>
      %c0_14 = arith.constant 0 : index
      %c0_15 = arith.constant 0 : index
      %c0_16 = arith.constant 0 : index
      %22 = vector.load %arg5[%c0_14, %c0_15, %c0_16] : memref<1x8x128xf32, #tpu.memory_space<vmem>>, vector<1x8x128xf32>
      %23 = vector.shape_cast %22 : vector<1x8x128xf32> to vector<8x128xf32>
      %24 = vector.shape_cast %21 : vector<8x128xf32> to vector<1x8x128xf32>
      tpu.vector_store %arg5[%c0_14, %c0_15, %c0_16], %24 {strides = array<i32>} : memref<1x8x128xf32, #tpu.memory_space<vmem>>, vector<1x8x128xf32>,
    } else {
    }
    %c0 = arith.constant 0 : index
    %c0_1 = arith.constant 0 : index
    %3 = vector.load %arg3[%c0, %c0_1] : memref<16x128xf32, #tpu.memory_space<vmem>>, vector<16x128xf32>
    %c0_2 = arith.constant 0 : index
    %c0_3 = arith.constant 0 : index
    %4 = vector.load %arg2[%c0_2, %c0_3] : memref<16x128xf32, #tpu.memory_space<vmem>>, vector<16x128xf32>
    %5 = arith.subf %3, %4 : vector<16x128xf32>
    %c1_i32 = arith.constant 1 : i32
    %6 = arith.muli %arg0, %c1_i32 : i32
    %7 = arith.addi %6, %arg1 : i32
    %c16_i32 = arith.constant 16 : i32
    %8 = arith.muli %7, %c16_i32 : i32
    %c16_i32_4 = arith.constant 16 : i32
    %9 = arith.addi %8, %c16_i32_4 : i32
    %c16_i32_5 = arith.constant 16 : i32
    %10 = arith.cmpi sle, %9, %c16_i32_5 : i32
    %11 = arith.extui %10 : i1 to i32
    %c0_i32_6 = arith.constant 0 : i32
    %12 = arith.cmpi ne, %11, %c0_i32_6 : i32
    scf.if %12 {
      %cst = arith.constant 0.000000e+00 : f32
      %17 = vector.broadcast %cst : f32 to vector<16x128xf32>
      %18 = arith.cmpf one, %3, %17 : vector<16x128xf32>
      %19 = arith.mulf %5, %5 : vector<16x128xf32>
      %cst_10 = arith.constant 0.000000e+00 : f32
      %20 = vector.broadcast %cst_10 : f32 to vector<16x128xf32>
      %21 = arith.select %18, %19, %20 : vector<16x128xi1>, vector<16x128xf32>
      %22 = arith.extui %18 : vector<16x128xi1> to vector<16x128xi32>
      %23 = arith.sitofp %22 : vector<16x128xi32> to vector<16x128xf32>
      %c0_11 = arith.constant 0 : index
      %c0_12 = arith.constant 0 : index
      %c0_13 = arith.constant 0 : index
      %24 = vector.load %arg4[%c0_11, %c0_12, %c0_13] : memref<1x8x128xf32, #tpu.memory_space<vmem>>, vector<1x8x128xf32>
      %25 = vector.shape_cast %24 : vector<1x8x128xf32> to vector<8x128xf32>
      %26 = vector.shape_cast %21 : vector<16x128xf32> to vector<2x8x128xf32>
      %cst_14 = arith.constant dense<0.000000e+00> : vector<8x128xf32>
      %27 = vector.multi_reduction <add>, %26, %cst_14 [0] : vector<2x8x128xf32> to vector<8x128xf32>
      %28 = arith.addf %25, %27 : vector<8x128xf32>
      %c0_15 = arith.constant 0 : index
      %c0_16 = arith.constant 0 : index
      %c0_17 = arith.constant 0 : index
      %29 = vector.load %arg4[%c0_15, %c0_16, %c0_17] : memref<1x8x128xf32, #tpu.memory_space<vmem>>, vector<1x8x128xf32>
      %30 = vector.shape_cast %29 : vector<1x8x128xf32> to vector<8x128xf32>
      %31 = vector.shape_cast %28 : vector<8x128xf32> to vector<1x8x128xf32>
      tpu.vector_store %arg4[%c0_15, %c0_16, %c0_17], %31 {strides = array<i32>} : memref<1x8x128xf32, #tpu.memory_space<vmem>>, vector<1x8x128xf32>,
      %c0_18 = arith.constant 0 : index
      %c0_19 = arith.constant 0 : index
      %c0_20 = arith.constant 0 : index
      %32 = vector.load %arg5[%c0_18, %c0_19, %c0_20] : memref<1x8x128xf32, #tpu.memory_space<vmem>>, vector<1x8x128xf32>
      %33 = vector.shape_cast %32 : vector<1x8x128xf32> to vector<8x128xf32>
      %34 = vector.shape_cast %23 : vector<16x128xf32> to vector<2x8x128xf32>
      %cst_21 = arith.constant dense<0.000000e+00> : vector<8x128xf32>
      %35 = vector.multi_reduction <add>, %34, %cst_21 [0] : vector<2x8x128xf32> to vector<8x128xf32>
      %36 = arith.addf %33, %35 : vector<8x128xf32>
      %c0_22 = arith.constant 0 : index
      %c0_23 = arith.constant 0 : index
      %c0_24 = arith.constant 0 : index
      %37 = vector.load %arg5[%c0_22, %c0_23, %c0_24] : memref<1x8x128xf32, #tpu.memory_space<vmem>>, vector<1x8x128xf32>
      %38 = vector.shape_cast %37 : vector<1x8x128xf32> to vector<8x128xf32>
      %39 = vector.shape_cast %36 : vector<8x128xf32> to vector<1x8x128xf32>
      tpu.vector_store %arg5[%c0_22, %c0_23, %c0_24], %39 {strides = array<i32>} : memref<1x8x128xf32, #tpu.memory_space<vmem>>, vector<1x8x128xf32>,
    } else {
    }
    %c16_i32_7 = arith.constant 16 : i32
    %13 = arith.addi %8, %c16_i32_7 : i32
    %c16_i32_8 = arith.constant 16 : i32
    %14 = arith.cmpi sgt, %13, %c16_i32_8 : i32
    %15 = arith.extui %14 : i1 to i32
    %c0_i32_9 = arith.constant 0 : i32
    %16 = arith.cmpi ne, %15, %c0_i32_9 : i32
    scf.if %16 {
      %17 = tpu.iota {dimensions = array<i32: 0>} : vector<16x128xi32>
      %18 = vector.broadcast %8 : i32 to vector<16x128xi32>
      %19 = arith.addi %18, %17 : vector<16x128xi32>
      %c16_i32_10 = arith.constant 16 : i32
      %20 = vector.broadcast %c16_i32_10 : i32 to vector<16x128xi32>
      %21 = arith.cmpi slt, %19, %20 : vector<16x128xi32>
      %cst = arith.constant 0.000000e+00 : f32
      %22 = vector.broadcast %cst : f32 to vector<16x128xf32>
      %23 = arith.cmpf one, %3, %22 : vector<16x128xf32>
      %24 = arith.andi %21, %23 : vector<16x128xi1>
      %25 = arith.mulf %5, %5 : vector<16x128xf32>
      %cst_11 = arith.constant 0.000000e+00 : f32
      %26 = vector.broadcast %cst_11 : f32 to vector<16x128xf32>
      %27 = arith.select %24, %25, %26 : vector<16x128xi1>, vector<16x128xf32>
      %28 = arith.extui %24 : vector<16x128xi1> to vector<16x128xi32>
      %29 = arith.sitofp %28 : vector<16x128xi32> to vector<16x128xf32>
      %c0_12 = arith.constant 0 : index
      %c0_13 = arith.constant 0 : index
      %c0_14 = arith.constant 0 : index
      %30 = vector.load %arg4[%c0_12, %c0_13, %c0_14] : memref<1x8x128xf32, #tpu.memory_space<vmem>>, vector<1x8x128xf32>
      %31 = vector.shape_cast %30 : vector<1x8x128xf32> to vector<8x128xf32>
      %32 = vector.shape_cast %27 : vector<16x128xf32> to vector<2x8x128xf32>
      %cst_15 = arith.constant dense<0.000000e+00> : vector<8x128xf32>
      %33 = vector.multi_reduction <add>, %32, %cst_15 [0] : vector<2x8x128xf32> to vector<8x128xf32>
      %34 = arith.addf %31, %33 : vector<8x128xf32>
      %c0_16 = arith.constant 0 : index
      %c0_17 = arith.constant 0 : index
      %c0_18 = arith.constant 0 : index
      %35 = vector.load %arg4[%c0_16, %c0_17, %c0_18] : memref<1x8x128xf32, #tpu.memory_space<vmem>>, vector<1x8x128xf32>
      %36 = vector.shape_cast %35 : vector<1x8x128xf32> to vector<8x128xf32>
      %37 = vector.shape_cast %34 : vector<8x128xf32> to vector<1x8x128xf32>
      tpu.vector_store %arg4[%c0_16, %c0_17, %c0_18], %37 {strides = array<i32>} : memref<1x8x128xf32, #tpu.memory_space<vmem>>, vector<1x8x128xf32>,
      %c0_19 = arith.constant 0 : index
      %c0_20 = arith.constant 0 : index
      %c0_21 = arith.constant 0 : index
      %38 = vector.load %arg5[%c0_19, %c0_20, %c0_21] : memref<1x8x128xf32, #tpu.memory_space<vmem>>, vector<1x8x128xf32>
      %39 = vector.shape_cast %38 : vector<1x8x128xf32> to vector<8x128xf32>
      %40 = vector.shape_cast %29 : vector<16x128xf32> to vector<2x8x128xf32>
      %cst_22 = arith.constant dense<0.000000e+00> : vector<8x128xf32>
      %41 = vector.multi_reduction <add>, %40, %cst_22 [0] : vector<2x8x128xf32> to vector<8x128xf32>
      %42 = arith.addf %39, %41 : vector<8x128xf32>
      %c0_23 = arith.constant 0 : index
      %c0_24 = arith.constant 0 : index
      %c0_25 = arith.constant 0 : index
      %43 = vector.load %arg5[%c0_23, %c0_24, %c0_25] : memref<1x8x128xf32, #tpu.memory_space<vmem>>, vector<1x8x128xf32>
      %44 = vector.shape_cast %43 : vector<1x8x128xf32> to vector<8x128xf32>
      %45 = vector.shape_cast %42 : vector<8x128xf32> to vector<1x8x128xf32>
      tpu.vector_store %arg5[%c0_23, %c0_24, %c0_25], %45 {strides = array<i32>} : memref<1x8x128xf32, #tpu.memory_space<vmem>>, vector<1x8x128xf32>,
    } else {
    }
    return
  }
  func.func @transform_0(%arg0: i32, %arg1: i32) -> (i32, i32) {
    %c1_i32 = arith.constant 1 : i32
    %0 = arith.muli %arg0, %c1_i32 : i32
    %1 = arith.addi %0, %arg1 : i32
    %c0_i32 = arith.constant 0 : i32
    %2 = arith.minsi %1, %c0_i32 : i32
    %c0_i32_0 = arith.constant 0 : i32
    %c0_i32_1 = arith.constant 0 : i32
    return %2, %c0_i32_0 : i32, i32
  }
  func.func @transform_1(%arg0: i32, %arg1: i32) -> (i32, i32) {
    %c1_i32 = arith.constant 1 : i32
    %0 = arith.muli %arg0, %c1_i32 : i32
    %1 = arith.addi %0, %arg1 : i32
    %c0_i32 = arith.constant 0 : i32
    %2 = arith.minsi %1, %c0_i32 : i32
    %c0_i32_0 = arith.constant 0 : i32
    %c0_i32_1 = arith.constant 0 : i32
    return %2, %c0_i32_0 : i32, i32
  }
  func.func @transform_2(%arg0: i32, %arg1: i32) -> (i32, i32, i32) {
    %c0_i32 = arith.constant 0 : i32
    %c0_i32_0 = arith.constant 0 : i32
    %c0_i32_1 = arith.constant 0 : i32
    return %arg0, %c0_i32, %c0_i32_0 : i32, i32, i32
  }
  func.func @transform_3(%arg0: i32, %arg1: i32) -> (i32, i32, i32) {
    %c0_i32 = arith.constant 0 : i32
    %c0_i32_0 = arith.constant 0 : i32
    %c0_i32_1 = arith.constant 0 : i32
    return %arg0, %c0_i32, %c0_i32_0 : i32, i32, i32
  }
}

</mosaic_0001>

<llo_original>
// kernel: tpu_custom_call.1
$region0: #{tpu_custom_call.1}
  #allocation0 [shape = 'u32[]', space=smem, size = 0x4, offset = 0x4, fixed_abs, tag = 'smem constant byte address 0x4 - core index']
  #allocation1 [shape = 'u32[144,128]{1,0:T(1,128)}', space=vmem, size = 0x12000, scoped, tag = 'internal scratch']
  %s0 = inlined_call_operand.hbm [shape: f32[16,128], index: 0, kind: input, shape index: {}]
  %s1 = inlined_call_operand.hbm [shape: f32[16,128], index: 1, kind: input, shape index: {}]
  %s2 = inlined_call_operand.hbm [shape: f32[1,8,128], index: 2, kind: output, shape index: {0}]
  %s3 = inlined_call_operand.hbm [shape: f32[1,8,128], index: 3, kind: output, shape index: {1}]
  %4 = xla_tuple %s2, %s3
  %s5 = sld [smem:[#allocation0]]
  $region46: #{tpu_custom_call.1} parent=0
    _
  %s7 = ssub.s32 1, %s5
  %s8 = scalar_select 0, %s7, %s5
  $region1: #{tpu_custom_call.1} parent=0
    #allocation2 [shape = 'u8[8192]{0}', space=vmem, size = 0x2000, scoped, tag = 'input window, operand 0, single buffered']
    #allocation3 [shape = 's32[1]{0}', space=sflag, size = 0x4, scoped, tag = 'scoped memory for tpu_custom_call.1']
    #allocation4 [shape = 's32[1]{0}', space=sflag, size = 0x4, scoped, tag = 'scoped memory for tpu_custom_call.1']
    #allocation5 [shape = 'u8[8192]{0}', space=vmem, size = 0x2000, scoped, tag = 'input window, operand 1, single buffered']
    #allocation6 [shape = 's32[1]{0}', space=sflag, size = 0x4, scoped, tag = 'scoped memory for tpu_custom_call.1']
    #allocation7 [shape = 'u8[4096]{0}', space=vmem, size = 0x1000, scoped, tag = 'output window, operand 0, single buffered']
    #allocation8 [shape = 'u8[4096]{0}', space=vmem, size = 0x1000, scoped, tag = 'output window, operand 1, single buffered']
    #allocation9 [shape = 's32[1]{0}', space=sflag, size = 0x4, scoped, tag = 'scoped memory for tpu_custom_call.1']
    %9 = vsyncpa [#allocation3], 0
    %10 = vsyncpa [#allocation6], 0
    %11 = vsyncpa [#allocation4], 0
    %12 = vsyncpa [#allocation9], 0
    // Predicated region
    $region2: #{tpu_custom_call.1} parent=1 // pred_check
      _
    $region3: #{tpu_custom_call.1} parent=1 // pred_check_branch
      %14 = sbr.rel (0) target = $region5
    $region4: #{tpu_custom_call.1} parent=1 // pred_region
      %s15 = sadd.s32 0, 0
      %p16 = scmp.lt.s32.totalorder %s15, 0
      %s17 = scalar_select %p16, %s15, 0
      %s18 = smul.u32 2, %s17
      %s20 = ssub.s32 256, 256
      %21 = vsyncadd [#allocation3], %s20
      %s22 = smul.addr %s18, 128
      %s23 = scalar_lea.hbm %s0, %s22
      %s24 = sshll.u32 [#allocation2], 4
      %s25 = int_to_ptr.vmem [resolvable:$true] %s24
      %30 = dma.hbm_to_vmem [thread:$0]  %s23, 256, %s25, [#allocation3], 128, 128, 8
    $region5: #{tpu_custom_call.1} parent=1 // pred_fallthru
      _
    // Predicated region
    $region6: #{tpu_custom_call.1} parent=1 // pred_check
      _
    $region7: #{tpu_custom_call.1} parent=1 // pred_check_branch
      %32 = sbr.rel (0) target = $region9
    $region8: #{tpu_custom_call.1} parent=1 // pred_region
      %s33 = sadd.s32 0, 0
      %p34 = scmp.lt.s32.totalorder %s33, 0
      %s35 = scalar_select %p34, %s33, 0
      %s36 = smul.u32 2, %s35
      %s38 = ssub.s32 256, 256
      %39 = vsyncadd [#allocation6], %s38
      %s40 = smul.addr %s36, 128
      %s41 = scalar_lea.hbm %s1, %s40
      %s42 = sshll.u32 [#allocation5], 4
      %s43 = int_to_ptr.vmem [resolvable:$true] %s42
      %48 = dma.hbm_to_vmem [thread:$0]  %s41, 256, %s43, [#allocation6], 128, 128, 8
    $region9: #{tpu_custom_call.1} parent=1 // pred_fallthru
      _
    // Predicated region
    $region10: #{tpu_custom_call.1} parent=1 // pred_check
      _
    $region11: #{tpu_custom_call.1} parent=1 // pred_check_branch
      %50 = sbr.rel (0) target = $region13
    $region12: #{tpu_custom_call.1} parent=1 // pred_region
      %51 = dma.done [#allocation3], 256
    $region13: #{tpu_custom_call.1} parent=1 // pred_fallthru
      _
    // Predicated region
    $region14: #{tpu_custom_call.1} parent=1 // pred_check
      _
    $region15: #{tpu_custom_call.1} parent=1 // pred_check_branch
      %53 = sbr.rel (0) target = $region17
    $region16: #{tpu_custom_call.1} parent=1 // pred_region
      %54 = dma.done [#allocation6], 256
    $region17: #{tpu_custom_call.1} parent=1 // pred_fallthru
      _
    %s55 = sadd.s32 0, 0
    %p56 = scmp.lt.s32.totalorder %s55, 0
    %s57 = scalar_select %p56, %s55, 0
    %s58 = smul.u32 2, %s57
    %s59 = sadd.s32 0, 0
    %p60 = scmp.lt.s32.totalorder %s59, 0
    %s61 = scalar_select %p60, %s59, 0
    %s62 = smul.u32 2, %s61
    %p63 = scmp.eq.s32.totalorder 0, 0
    // Predicated region
    $region18: #{tpu_custom_call.1} parent=1 // pred_check
      %p64 = pneg %p63
    $region19: #{tpu_custom_call.1} parent=1 // pred_check_branch
      %66 = sbr.rel (%p64) target = $region21
    $region20: #{tpu_custom_call.1} parent=1 // pred_region
      %67 = vst [vmem:[#allocation7] sm:$0xff] 0.0
      %68 = vst [vmem:[#allocation8] sm:$0xff] 0.0
    $region21: #{tpu_custom_call.1} parent=1 // pred_fallthru
      _
    %v69 = vld [vmem:[#allocation5] sm:$0xff]
    %v70 = vld [vmem:[#allocation5 + $0x8] sm:$0xff]
    %v71 = vld [vmem:[#allocation2] sm:$0xff]
    %v72 = vld [vmem:[#allocation2 + $0x8] sm:$0xff]
    %v73 = vsub.f32 %v69, %v71
    %v74 = vsub.f32 %v70, %v72
    %s75 = sadd.s32 0, 0
    %s76 = smul.u32 %s75, 16
    %s77 = sadd.s32 %s76, 16
    %p78 = scmp.le.s32.totalorder %s77, 16
    // Predicated region
    $region22: #{tpu_custom_call.1} parent=1 // pred_check
      %p79 = pneg %p78
    $region23: #{tpu_custom_call.1} parent=1 // pred_check_branch
      %81 = sbr.rel (%p79) target = $region25
    $region24: #{tpu_custom_call.1} parent=1 // pred_region
      %vm82 = vcmp.ne.f32.partialorder %v69, 0.0
      %vm83 = vcmp.ne.f32.partialorder %v70, 0.0
      %v84 = vmul.f32 %v73, %v73
      %v85 = vmul.f32 %v74, %v74
      %v86 = vsel %vm82, %v84, 0.0
      %v87 = vsel %vm83, %v85, 0.0
      %v88 = vsel %vm82, 1, 0
      %v89 = vsel %vm83, 1, 0
      %v90 = vcvt.s32.f32 %v88
      %v91 = vcvt.s32.f32 %v89
      %v92 = vld [vmem:[#allocation7] sm:$0xff]
      %v93 = vadd.f32 %v86, %v87
      %v94 = vadd.f32 %v92, %v93
      %95 = vst [vmem:[#allocation7] sm:$0xff] %v94
      %v96 = vld [vmem:[#allocation8] sm:$0xff]
      %v97 = vadd.f32 %v90, %v91
      %v98 = vadd.f32 %v96, %v97
      %99 = vst [vmem:[#allocation8] sm:$0xff] %v98
    $region25: #{tpu_custom_call.1} parent=1 // pred_fallthru
      _
    %p100 = scmp.gt.s32.totalorder %s77, 16
    // Predicated region
    $region26: #{tpu_custom_call.1} parent=1 // pred_check
      %p101 = pneg %p100
    $region27: #{tpu_custom_call.1} parent=1 // pred_check_branch
      %103 = sbr.rel (%p101) target = $region29
    $region28: #{tpu_custom_call.1} parent=1 // pred_region
      %v104 = vlaneseq
      %v105 = vshrl.u32 %v104, 7
      %v106 = vadd.s32 %v105, 8
      %v107 = vstv %s76
      %v108 = vadd.s32 %v107, %v105
      %v109 = vadd.s32 %v107, %v106
      %vm110 = vcmp.lt.s32.totalorder %v108, 16
      %vm111 = vcmp.lt.s32.totalorder %v109, 16
      %vm112 = vcmp.ne.f32.partialorder %v69, 0.0
      %vm113 = vcmp.ne.f32.partialorder %v70, 0.0
      %vm114 = vmand %vm110, %vm112
      %vm115 = vmand %vm111, %vm113
      %v116 = vmul.f32 %v73, %v73
      %v117 = vmul.f32 %v74, %v74
      %v118 = vsel %vm114, %v116, 0.0
      %v119 = vsel %vm115, %v117, 0.0
      %v120 = vsel %vm114, 1, 0
      %v121 = vsel %vm115, 1, 0
      %v122 = vcvt.s32.f32 %v120
      %v123 = vcvt.s32.f32 %v121
      %v124 = vld [vmem:[#allocation7] sm:$0xff]
      %v125 = vadd.f32 %v118, %v119
      %v126 = vadd.f32 %v124, %v125
      %127 = vst [vmem:[#allocation7] sm:$0xff] %v126
      %v128 = vld [vmem:[#allocation8] sm:$0xff]
      %v129 = vadd.f32 %v122, %v123
      %v130 = vadd.f32 %v128, %v129
      %131 = vst [vmem:[#allocation8] sm:$0xff] %v130
    $region29: #{tpu_custom_call.1} parent=1 // pred_fallthru
      _
    // Predicated region
    $region30: #{tpu_custom_call.1} parent=1 // pred_check
      _
    $region31: #{tpu_custom_call.1} parent=1 // pred_check_branch
      %133 = sbr.rel (0) target = $region33
    $region32: #{tpu_custom_call.1} parent=1 // pred_region
      %s135 = ssub.s32 128, 128
      %136 = vsyncadd [#allocation4], %s135
      %s138 = sshll.u32 [#allocation7], 4
      %s139 = int_to_ptr.vmem [resolvable:$true] %s138
      %141 = dma.vmem_to_hbm [thread:$0]  %s139, 128, %s2, [#allocation4]
    $region33: #{tpu_custom_call.1} parent=1 // pred_fallthru
      _
    // Predicated region
    $region34: #{tpu_custom_call.1} parent=1 // pred_check
      _
    $region35: #{tpu_custom_call.1} parent=1 // pred_check_branch
      %143 = sbr.rel (0) target = $region37
    $region36: #{tpu_custom_call.1} parent=1 // pred_region
      %s145 = ssub.s32 128, 128
      %146 = vsyncadd [#allocation9], %s145
      %s148 = sshll.u32 [#allocation8], 4
      %s149 = int_to_ptr.vmem [resolvable:$true] %s148
      %151 = dma.vmem_to_hbm [thread:$0]  %s149, 128, %s3, [#allocation9]
    $region37: #{tpu_custom_call.1} parent=1 // pred_fallthru
      _
    // Predicated region
    $region38: #{tpu_custom_call.1} parent=1 // pred_check
      _
    $region39: #{tpu_custom_call.1} parent=1 // pred_check_branch
      %153 = sbr.rel (0) target = $region41
    $region40: #{tpu_custom_call.1} parent=1 // pred_region
      %154 = dma.done [#allocation4], 128
    $region41: #{tpu_custom_call.1} parent=1 // pred_fallthru
      _
    // Predicated region
    $region42: #{tpu_custom_call.1} parent=1 // pred_check
      _
    $region43: #{tpu_custom_call.1} parent=1 // pred_check_branch
      %156 = sbr.rel (0) target = $region45
    $region44: #{tpu_custom_call.1} parent=1 // pred_region
      %157 = dma.done [#allocation9], 128
    $region45: #{tpu_custom_call.1} parent=1 // pred_fallthru
      _
    %158 = vsyncpa [#allocation3], 1
    %159 = vsyncpa [#allocation6], 1
    %160 = vsyncpa [#allocation4], 1
    %161 = vsyncpa [#allocation9], 1

</llo_original>
